<compile_context>
chip_gen: v7x
topology: tpu7x:2x2x1
jax: 0.10.0
libtpu: 0.0.40
codegen_flags: <defaults>
</compile_context>

<pallas_src>
import jax
import jax.numpy as jnp
from jax.experimental import pallas as pl
from jax.experimental.pallas import tpu as pltpu

_HIDDEN_PAD = 128  # pad hidden dim to the full 128-lane vreg / MXU width


def _mlp_kernel(obs_ref, w1_ref, b1_ref, w2_ref, b2_ref, out_ref):
    # Hidden layer: [TILE_B, in] @ [in, 128] + [1, 128]; padded hidden columns are zero,
    # so tanh(0 + 0) = 0 for them and (with zero w2 rows) they contribute nothing.
    h = jnp.dot(obs_ref[...], w1_ref[...], preferred_element_type=jnp.float32)
    h = jnp.tanh(h + b1_ref[...])
    # Output layer: [TILE_B, 128] @ [128, out] + [1, out]
    o = jnp.dot(h, w2_ref[...], preferred_element_type=jnp.float32)
    out_ref[...] = (o + b2_ref[...]).astype(out_ref.dtype)


def _round_up(x, m):
    return ((x + m - 1) // m) * m


def state_to_action(obs, w1, b1, w2, b2, *, tile_b=512):
    """obs: [B, in_features] f32 -> [B, out_actions] f32 (Linear -> Tanh -> Linear)."""
    B, in_features = obs.shape
    hidden, out_actions = w2.shape
    assert w1.shape == (in_features, hidden)

    # --- one-time padding in the wrapper (not per grid step) ---
    h_pad = _round_up(max(hidden, _HIDDEN_PAD), 128)
    w1_p = jnp.pad(w1.astype(jnp.float32), ((0, 0), (0, h_pad - hidden)))
    b1_p = jnp.pad(b1.astype(jnp.float32).reshape(1, -1), ((0, 0), (0, h_pad - hidden)))
    w2_p = jnp.pad(w2.astype(jnp.float32), ((0, h_pad - hidden), (0, 0)))
    b2_p = b2.astype(jnp.float32).reshape(1, -1)

    # --- batch tiling: tile is a multiple of 8 (sublane), capped for VMEM (v7x 64 MiB) ---
    tile_b = _round_up(min(tile_b, _round_up(B, 8)), 8)
    padded_b = _round_up(B, tile_b)
    obs_p = obs.astype(jnp.float32)
    if padded_b != B:
        obs_p = jnp.pad(obs_p, ((0, padded_b - B), (0, 0)))

    grid = (padded_b // tile_b,)

    cost = pl.CostEstimate(
        flops=2 * B * (in_features * hidden + hidden * out_actions),
        transcendentals=B * hidden,
        bytes_accessed=4 * (obs.size + w1.size + b1.size + w2.size + b2.size + B * out_actions),
    )

    out = pl.pallas_call(
        _mlp_kernel,
        out_shape=jax.ShapeDtypeStruct((padded_b, out_actions), jnp.float32),
        grid=grid,
        in_specs=[
            pl.BlockSpec((tile_b, in_features), lambda i: (i, 0)),   # obs: streamed per tile
            pl.BlockSpec((in_features, h_pad), lambda i: (0, 0)),    # w1: resident
            pl.BlockSpec((1, h_pad), lambda i: (0, 0)),              # b1: resident
            pl.BlockSpec((h_pad, out_actions), lambda i: (0, 0)),    # w2: resident
            pl.BlockSpec((1, out_actions), lambda i: (0, 0)),        # b2: resident
        ],
        out_specs=pl.BlockSpec((tile_b, out_actions), lambda i: (i, 0)),
        compiler_params=pltpu.CompilerParams(
            dimension_semantics=("parallel",),          # shard batch tiles across TCs on v7x
            vmem_limit_bytes=32 * 1024 * 1024,          # safe on 64 MiB (v7x) and 128 MiB (v5e/v6e)
        ),
        cost_estimate=cost,
    )(obs_p, w1_p, b1_p, w2_p, b2_p)

    return out[:B] if padded_b != B else out


def init_params(key, in_features, out_actions, hidden_features=64):
    """Deterministic init mimicking nn.Linear's default uniform(-1/sqrt(fan_in), 1/sqrt(fan_in))."""
    k1, k2, k3, k4 = jax.random.split(key, 4)
    bound1 = 1.0 / jnp.sqrt(in_features)
    bound2 = 1.0 / jnp.sqrt(hidden_features)
    w1 = jax.random.uniform(k1, (in_features, hidden_features), jnp.float32, -bound1, bound1)
    b1 = jax.random.uniform(k2, (hidden_features,), jnp.float32, -bound1, bound1)
    w2 = jax.random.uniform(k3, (hidden_features, out_actions), jnp.float32, -bound2, bound2)
    b2 = jax.random.uniform(k4, (out_actions,), jnp.float32, -bound2, bound2)
    return w1, b1, w2, b2


if __name__ == "__main__":
    batch = 8
    in_features = 32     # observation size
    out_actions = 8      # action size
    hidden = 64

    key = jax.random.PRNGKey(0)
    k_obs, k_params = jax.random.split(key)
    obs = jax.random.normal(k_obs, (batch, in_features), jnp.float32)
    w1, b1, w2, b2 = init_params(k_params, in_features, out_actions, hidden)

    out = state_to_action(obs, w1, b1, w2, b2)
    out = jax.block_until_ready(out)

    # Pure-JAX reference check.
    ref = jnp.tanh(obs @ w1 + b1) @ w2 + b2
    assert out.shape == (batch, out_actions)
    assert jnp.allclose(out, ref, atol=1e-5, rtol=1e-5)

    # Also exercise a larger, non-tile-aligned batch to validate the grid + padding path.
    big_obs = jax.random.normal(jax.random.PRNGKey(1), (1000, in_features), jnp.float32)
    big_out = jax.block_until_ready(state_to_action(big_obs, w1, b1, w2, b2))
    big_ref = jnp.tanh(big_obs @ w1 + b1) @ w2 + b2
    assert big_out.shape == (1000, out_actions)
    assert jnp.allclose(big_out, big_ref, atol=1e-5, rtol=1e-5)

    print("KERNEL_OK")
</pallas_src>

<mosaic_0001>
module attributes {stable_mosaic.version = 11 : i64} {
  func.func @_mlp_kernel(%arg0: i32, %arg1: memref<8x32xf32, #tpu.memory_space<vmem>>, %arg2: memref<32x128xf32, #tpu.memory_space<vmem>>, %arg3: memref<1x128xf32, #tpu.memory_space<vmem>>, %arg4: memref<128x8xf32, #tpu.memory_space<vmem>>, %arg5: memref<1x8xf32, #tpu.memory_space<vmem>>, %arg6: memref<8x8xf32, #tpu.memory_space<vmem>>) attributes {dimension_semantics = [#tpu.dimension_semantics<parallel>], iteration_bounds = array<i64: 1>, scalar_prefetch = 0 : i64, scratch_operands = 0 : i64, tpu.core_type = #tpu.core_type<tc>, window_params = [{transform_indices = @transform_0, window_bounds = array<i64: 8, 32>}, {pipeline_mode = #tpu.pipeline_mode<synchronous>, transform_indices = @transform_1, window_bounds = array<i64: 32, 128>}, {pipeline_mode = #tpu.pipeline_mode<synchronous>, transform_indices = @transform_2, window_bounds = array<i64: 1, 128>}, {pipeline_mode = #tpu.pipeline_mode<synchronous>, transform_indices = @transform_3, window_bounds = array<i64: 128, 8>}, {pipeline_mode = #tpu.pipeline_mode<synchronous>, transform_indices = @transform_4, window_bounds = array<i64: 1, 8>}, {transform_indices = @transform_5, window_bounds = array<i64: 8, 8>}]} {
    %c0 = arith.constant 0 : index
    %c0_0 = arith.constant 0 : index
    %0 = vector.load %arg1[%c0, %c0_0] : memref<8x32xf32, #tpu.memory_space<vmem>>, vector<8x32xf32>
    %c0_1 = arith.constant 0 : index
    %c0_2 = arith.constant 0 : index
    %1 = vector.load %arg2[%c0_1, %c0_2] : memref<32x128xf32, #tpu.memory_space<vmem>>, vector<32x128xf32>
    %cst = arith.constant dense<0.000000e+00> : vector<8x128xf32>
    %2 = tpu.matmul %0, %1, %cst {dimension_numbers = #tpu.dot_dimension_numbers<[1], [0], [0], [1], [0, 0, 1, 1], [], []>} : vector<8x32xf32>, vector<32x128xf32>, vector<8x128xf32> -> vector<8x128xf32>
    %c0_3 = arith.constant 0 : index
    %c0_4 = arith.constant 0 : index
    %3 = vector.load %arg3[%c0_3, %c0_4] : memref<1x128xf32, #tpu.memory_space<vmem>>, vector<1x128xf32>
    %4 = vector.broadcast %3 : vector<1x128xf32> to vector<8x128xf32>
    %5 = arith.addf %2, %4 : vector<8x128xf32>
    %6 = math.tanh %5 : vector<8x128xf32>
    %c0_5 = arith.constant 0 : index
    %c0_6 = arith.constant 0 : index
    %7 = vector.load %arg4[%c0_5, %c0_6] : memref<128x8xf32, #tpu.memory_space<vmem>>, vector<128x8xf32>
    %cst_7 = arith.constant dense<0.000000e+00> : vector<8x8xf32>
    %8 = tpu.matmul %6, %7, %cst_7 {dimension_numbers = #tpu.dot_dimension_numbers<[1], [0], [0], [1], [0, 0, 1, 1], [], []>} : vector<8x128xf32>, vector<128x8xf32>, vector<8x8xf32> -> vector<8x8xf32>
    %c0_8 = arith.constant 0 : index
    %c0_9 = arith.constant 0 : index
    %9 = vector.load %arg5[%c0_8, %c0_9] : memref<1x8xf32, #tpu.memory_space<vmem>>, vector<1x8xf32>
    %10 = vector.broadcast %9 : vector<1x8xf32> to vector<8x8xf32>
    %11 = arith.addf %8, %10 : vector<8x8xf32>
    %c0_10 = arith.constant 0 : index
    %c0_11 = arith.constant 0 : index
    %12 = vector.load %arg6[%c0_10, %c0_11] : memref<8x8xf32, #tpu.memory_space<vmem>>, vector<8x8xf32>
    tpu.vector_store %arg6[%c0_10, %c0_11], %11 {strides = array<i32>} : memref<8x8xf32, #tpu.memory_space<vmem>>, vector<8x8xf32>,
    return
  }
  func.func @transform_0(%arg0: i32) -> (i32, i32) {
    %c0_i32 = arith.constant 0 : i32
    %c0_i32_0 = arith.constant 0 : i32
    return %arg0, %c0_i32 : i32, i32
  }
  func.func @transform_1(%arg0: i32) -> (i32, i32) {
    %c0_i32 = arith.constant 0 : i32
    %c0_i32_0 = arith.constant 0 : i32
    %c0_i32_1 = arith.constant 0 : i32
    return %c0_i32, %c0_i32_0 : i32, i32
  }
  func.func @transform_2(%arg0: i32) -> (i32, i32) {
    %c0_i32 = arith.constant 0 : i32
    %c0_i32_0 = arith.constant 0 : i32
    %c0_i32_1 = arith.constant 0 : i32
    return %c0_i32, %c0_i32_0 : i32, i32
  }
  func.func @transform_3(%arg0: i32) -> (i32, i32) {
    %c0_i32 = arith.constant 0 : i32
    %c0_i32_0 = arith.constant 0 : i32
    %c0_i32_1 = arith.constant 0 : i32
    return %c0_i32, %c0_i32_0 : i32, i32
  }
  func.func @transform_4(%arg0: i32) -> (i32, i32) {
    %c0_i32 = arith.constant 0 : i32
    %c0_i32_0 = arith.constant 0 : i32
    %c0_i32_1 = arith.constant 0 : i32
    return %c0_i32, %c0_i32_0 : i32, i32
  }
  func.func @transform_5(%arg0: i32) -> (i32, i32) {
    %c0_i32 = arith.constant 0 : i32
    %c0_i32_0 = arith.constant 0 : i32
    return %arg0, %c0_i32 : i32, i32
  }
}

</mosaic_0001>

<llo_original>
// kernel: tpu_custom_call.1
$region0: #{tpu_custom_call.1}
  #allocation0 [shape = 'u32[]', space=smem, size = 0x4, offset = 0x4, fixed_abs, tag = 'smem constant byte address 0x4 - core index']
  #allocation1 [shape = 'u32[144,128]{1,0:T(1,128)}', space=vmem, size = 0x12000, scoped, tag = 'internal scratch']
  %s0 = inlined_call_operand.vmem [shape: f32[8,32], index: 0, kind: input, shape index: {}]
  %s1 = inlined_call_operand.vmem [shape: f32[32,128], index: 1, kind: input, shape index: {}]
  %s2 = inlined_call_operand.vmem [shape: f32[1,128], index: 2, kind: input, shape index: {}]
  %s3 = inlined_call_operand.vmem [shape: f32[128,8], index: 3, kind: input, shape index: {}]
  %s4 = inlined_call_operand.vmem [shape: f32[1,8], index: 4, kind: input, shape index: {}]
  %s5 = inlined_call_operand.hbm [shape: f32[8,8], index: 5, kind: output, shape index: {}]
  %s6 = sld [smem:[#allocation0]]
  $region30: #{tpu_custom_call.1} parent=0
    _
  %s8 = ssub.s32 1, %s6
  %s9 = scalar_select 0, %s8, %s6
  $region1: #{tpu_custom_call.1} parent=0
    #allocation2 [shape = 'u8[4096]{0}', space=vmem, size = 0x1000, scoped, tag = 'output window, operand 0, single buffered']
    #allocation3 [shape = 's32[1]{0}', space=sflag, size = 0x4, scoped, tag = 'scoped memory for tpu_custom_call.1']
    %10 = vsyncpa [#allocation3], 0
    // Predicated region
    $region2: #{tpu_custom_call.1} parent=1 // pred_check
      _
    $region3: #{tpu_custom_call.1} parent=1 // pred_check_branch
      %12 = sbr.rel (0) target = $region5
    $region4: #{tpu_custom_call.1} parent=1 // pred_region
      _
    $region5: #{tpu_custom_call.1} parent=1 // pred_fallthru
      _
    // Predicated region
    $region6: #{tpu_custom_call.1} parent=1 // pred_check
      _
    $region7: #{tpu_custom_call.1} parent=1 // pred_check_branch
      %14 = sbr.rel (0) target = $region9
    $region8: #{tpu_custom_call.1} parent=1 // pred_region
      _
    $region9: #{tpu_custom_call.1} parent=1 // pred_fallthru
      _
    // Predicated region
    $region10: #{tpu_custom_call.1} parent=1 // pred_check
      _
    $region11: #{tpu_custom_call.1} parent=1 // pred_check_branch
      %16 = sbr.rel (0) target = $region13
    $region12: #{tpu_custom_call.1} parent=1 // pred_region
      _
    $region13: #{tpu_custom_call.1} parent=1 // pred_fallthru
      _
    // Predicated region
    $region14: #{tpu_custom_call.1} parent=1 // pred_check
      _
    $region15: #{tpu_custom_call.1} parent=1 // pred_check_branch
      %18 = sbr.rel (0) target = $region17
    $region16: #{tpu_custom_call.1} parent=1 // pred_region
      _
    $region17: #{tpu_custom_call.1} parent=1 // pred_fallthru
      _
    // Predicated region
    $region18: #{tpu_custom_call.1} parent=1 // pred_check
      _
    $region19: #{tpu_custom_call.1} parent=1 // pred_check_branch
      %20 = sbr.rel (0) target = $region21
    $region20: #{tpu_custom_call.1} parent=1 // pred_region
      _
    $region21: #{tpu_custom_call.1} parent=1 // pred_fallthru
      _
    %v21 = vld [vmem:[%s0] sm:$0xff]
    %v22 = vld [vmem:[%s1] sm:$0xff]
    %v23 = vld [vmem:[%s1 + $0x8] sm:$0xff]
    %v24 = vld [vmem:[%s1 + $0x10] sm:$0xff]
    %v25 = vld [vmem:[%s1 + $0x18] sm:$0xff]
    %v26 = vld [vmem:[%s2] sm:$0x1]
    %v28 = vlaneseq
    %v29 = vshrl.u32 %v28, 7
    %v30 = vsub.s32 0, %v29
    %v31 = vrot.slane %v26, %v30
    %vm33 = vcmask 261120
    %v35 = vsel %vm33, %v21, 0
    %37 = vmatprep.subr.mxu0 0.0
    %38 = vmatpush1.msra.mxu0 %v22
    %39 = vmatprep.subr.mxu0 0.0
    %40 = vmatpush1.msra.mxu0 %v23
    %41 = vmatprep.subr.mxu0 0.0
    %42 = vmatpush1.msra.mxu0 %v24
    %43 = vmatprep.subr.mxu0 0.0
    %44 = vmatpush1.msra.mxu0 %v25
    %45 = vmatprep.subr.mxu0 0.0
    %46 = vmatpush1.msra.mxu0 0.0
    %47 = vmatprep.subr.mxu0 0.0
    %48 = vmatpush1.msra.mxu0 0.0
    %49 = vmatprep.subr.mxu0 0.0
    %50 = vmatpush1.msra.mxu0 0.0
    %51 = vmatprep.subr.mxu0 0.0
    %52 = vmatpush1.msra.mxu0 0.0
    %53 = vmatprep.subr.mxu0 0.0
    %54 = vmatpush1.msra.mxu0 0.0
    %55 = vmatprep.subr.mxu0 0.0
    %56 = vmatpush1.msra.mxu0 0.0
    %57 = vmatprep.subr.mxu0 0.0
    %58 = vmatpush1.msra.mxu0 0.0
    %59 = vmatprep.subr.mxu0 0.0
    %60 = vmatpush1.msra.mxu0 0.0
    %61 = vmatprep.subr.mxu0 0.0
    %62 = vmatpush1.msra.mxu0 0.0
    %63 = vmatprep.subr.mxu0 0.0
    %64 = vmatpush1.msra.mxu0 0.0
    %65 = vmatprep.subr.mxu0 0.0
    %66 = vmatpush1.msra.mxu0 0.0
    %67 = vmatprep.subr.mxu0 0.0
    %68 = vmatpush1.msra.mxu0 0.0
    %69 = vmatprep.subr.mxu0 0.0
    %70 = vmatpush1.msra.mxu0 0.0
    %71 = vmatprep.subr.mxu0 0.0
    %72 = vmatpush1.msra.mxu0 0.0
    %73 = vmatprep.subr.mxu0 0.0
    %74 = vmatpush1.msra.mxu0 0.0
    %75 = vmatprep.subr.mxu0 0.0
    %76 = vmatpush1.msra.mxu0 0.0
    %77 = vmatprep.subr.mxu0 0.0
    %78 = vmatpush1.msra.mxu0 0.0
    %79 = vmatprep.subr.mxu0 0.0
    %80 = vmatpush1.msra.mxu0 0.0
    %81 = vmatprep.subr.mxu0 0.0
    %82 = vmatpush1.msra.mxu0 0.0
    %83 = vmatprep.subr.mxu0 0.0
    %84 = vmatpush1.msra.mxu0 0.0
    %85 = vmatprep.subr.mxu0 0.0
    %86 = vmatpush1.msra.mxu0 0.0
    %87 = vmatprep.subr.mxu0 0.0
    %88 = vmatpush1.msra.mxu0 0.0
    %89 = vmatprep.subr.mxu0 0.0
    %90 = vmatpush1.msra.mxu0 0.0
    %91 = vmatprep.subr.mxu0 0.0
    %92 = vmatpush1.msra.mxu0 0.0
    %93 = vmatprep.subr.mxu0 0.0
    %94 = vmatpush1.msra.mxu0 0.0
    %95 = vmatprep.subr.mxu0 0.0
    %96 = vmatpush1.msra.mxu0 0.0
    %97 = vmatprep.subr.mxu0 0.0
    %98 = vmatpush1.msra.mxu0 0.0
    %99 = vmatprep.subr.mxu0 0.0
    %100 = vmatpush1.msra.mxu0 0.0
    %101 = vmatprep.mubr.f32.mxu0 0.0
    %102 = vmatmul.mubr.f32.gmra.mrb[0].mxu0 %v35
    %v103 = vpop.f32.mrb[0].mxu0
    %v104 = vadd.f32 %v31, %v103
    %v105 = vpop.f32.mrb[0].mxu0
    %106 = vdwg.mxu0
    %v107 = vtanh.pop %v104
    %v108 = vld [vmem:[%s3] sm:$0xff]
    %v109 = vld [vmem:[%s3 + $0x8] sm:$0xff]
    %v110 = vld [vmem:[%s3 + $0x10] sm:$0xff]
    %v111 = vld [vmem:[%s3 + $0x18] sm:$0xff]
    %v112 = vld [vmem:[%s3 + $0x20] sm:$0xff]
    %v113 = vld [vmem:[%s3 + $0x28] sm:$0xff]
    %v114 = vld [vmem:[%s3 + $0x30] sm:$0xff]
    %v115 = vld [vmem:[%s3 + $0x38] sm:$0xff]
    %v116 = vld [vmem:[%s3 + $0x40] sm:$0xff]
    %v117 = vld [vmem:[%s3 + $0x48] sm:$0xff]
    %v118 = vld [vmem:[%s3 + $0x50] sm:$0xff]
    %v119 = vld [vmem:[%s3 + $0x58] sm:$0xff]
    %v120 = vld [vmem:[%s3 + $0x60] sm:$0xff]
    %v121 = vld [vmem:[%s3 + $0x68] sm:$0xff]
    %v122 = vld [vmem:[%s3 + $0x70] sm:$0xff]
    %v123 = vld [vmem:[%s3 + $0x78] sm:$0xff]
    %v124 = vld [vmem:[%s4] sm:$0x1]
    %v126 = vlaneseq
    %v127 = vshrl.u32 %v126, 7
    %v128 = vsub.s32 0, %v127
    %v129 = vrot.slane %v124, %v128
    %131 = vmatprep.subr.mxu0 0.0
    %132 = vmatpush1.msra.mxu0 %v108
    %133 = vmatprep.subr.mxu0 0.0
    %134 = vmatpush1.msra.mxu0 %v109
    %135 = vmatprep.subr.mxu0 0.0
    %136 = vmatpush1.msra.mxu0 %v110
    %137 = vmatprep.subr.mxu0 0.0
    %138 = vmatpush1.msra.mxu0 %v111
    %139 = vmatprep.subr.mxu0 0.0
    %140 = vmatpush1.msra.mxu0 %v112
    %141 = vmatprep.subr.mxu0 0.0
    %142 = vmatpush1.msra.mxu0 %v113
    %143 = vmatprep.subr.mxu0 0.0
    %144 = vmatpush1.msra.mxu0 %v114
    %145 = vmatprep.subr.mxu0 0.0
    %146 = vmatpush1.msra.mxu0 %v115
    %147 = vmatprep.subr.mxu0 0.0
    %148 = vmatpush1.msra.mxu0 %v116
    %149 = vmatprep.subr.mxu0 0.0
    %150 = vmatpush1.msra.mxu0 %v117
    %151 = vmatprep.subr.mxu0 0.0
    %152 = vmatpush1.msra.mxu0 %v118
    %153 = vmatprep.subr.mxu0 0.0
    %154 = vmatpush1.msra.mxu0 %v119
    %155 = vmatprep.subr.mxu0 0.0
    %156 = vmatpush1.msra.mxu0 %v120
    %157 = vmatprep.subr.mxu0 0.0
    %158 = vmatpush1.msra.mxu0 %v121
    %159 = vmatprep.subr.mxu0 0.0
    %160 = vmatpush1.msra.mxu0 %v122
    %161 = vmatprep.subr.mxu0 0.0
    %162 = vmatpush1.msra.mxu0 %v123
    %163 = vmatprep.subr.mxu0 0.0
    %164 = vmatpush1.msra.mxu0 0.0
    %165 = vmatprep.subr.mxu0 0.0
    %166 = vmatpush1.msra.mxu0 0.0
    %167 = vmatprep.subr.mxu0 0.0
    %168 = vmatpush1.msra.mxu0 0.0
    %169 = vmatprep.subr.mxu0 0.0
    %170 = vmatpush1.msra.mxu0 0.0
    %171 = vmatprep.subr.mxu0 0.0
    %172 = vmatpush1.msra.mxu0 0.0
    %173 = vmatprep.subr.mxu0 0.0
    %174 = vmatpush1.msra.mxu0 0.0
    %175 = vmatprep.subr.mxu0 0.0
    %176 = vmatpush1.msra.mxu0 0.0
    %177 = vmatprep.subr.mxu0 0.0
    %178 = vmatpush1.msra.mxu0 0.0
    %179 = vmatprep.subr.mxu0 0.0
    %180 = vmatpush1.msra.mxu0 0.0
    %181 = vmatprep.subr.mxu0 0.0
    %182 = vmatpush1.msra.mxu0 0.0
    %183 = vmatprep.subr.mxu0 0.0
    %184 = vmatpush1.msra.mxu0 0.0
    %185 = vmatprep.subr.mxu0 0.0
    %186 = vmatpush1.msra.mxu0 0.0
    %187 = vmatprep.subr.mxu0 0.0
    %188 = vmatpush1.msra.mxu0 0.0
    %189 = vmatprep.subr.mxu0 0.0
    %190 = vmatpush1.msra.mxu0 0.0
    %191 = vmatprep.subr.mxu0 0.0
    %192 = vmatpush1.msra.mxu0 0.0
    %193 = vmatprep.subr.mxu0 0.0
    %194 = vmatpush1.msra.mxu0 0.0
    %195 = vmatprep.mubr.f32.mxu0 0.0
    %196 = vmatmul.mubr.f32.gmra.mrb[0].mxu0 %v107
    %v197 = vpop.f32.mrb[0].mxu0
    %v198 = vadd.f32 %v129, %v197
    %v199 = vpop.f32.mrb[0].mxu0
    %200 = vdwg.mxu0
    %vm201 = vcmask 64512
    %202 = vst.msk [vmem:[#allocation2] sm:$0xff] %vm201, %v198
    // Predicated region
    $region22: #{tpu_custom_call.1} parent=1 // pred_check
      _
    $region23: #{tpu_custom_call.1} parent=1 // pred_check_branch
      %204 = sbr.rel (0) target = $region25
    $region24: #{tpu_custom_call.1} parent=1 // pred_region
      %s206 = ssub.s32 128, 128
      %207 = vsyncadd [#allocation3], %s206
      %s209 = sshll.u32 [#allocation2], 4
      %s210 = int_to_ptr.vmem [resolvable:$true] %s209
      %212 = dma.vmem_to_hbm [thread:$0]  %s210, 128, %s5, [#allocation3]
    $region25: #{tpu_custom_call.1} parent=1 // pred_fallthru
      _
    // Predicated region
    $region26: #{tpu_custom_call.1} parent=1 // pred_check
      _
    $region27: #{tpu_custom_call.1} parent=1 // pred_check_branch
      %214 = sbr.rel (0) target = $region29
    $region28: #{tpu_custom_call.1} parent=1 // pred_region
      %215 = dma.done [#allocation3], 128
    $region29: #{tpu_custom_call.1} parent=1 // pred_fallthru
      _
    %216 = vsyncpa [#allocation3], 1

</llo_original>
